<compile_context>
chip_gen: v7x
topology: tpu7x:2x2x1
jax: 0.10.0
libtpu: 0.0.40
codegen_flags: <defaults>
</compile_context>

<pallas_src>
import functools

import jax
import jax.numpy as jnp
from jax import lax
from jax.experimental import pallas as pl
from jax.experimental.pallas import tpu as pltpu

NUM_CLASSES = 7
CLS_PAD = 128  # lane-dense classifier output width


def rnn_classify_kernel(x_ref, proj_ref, whh_ref, wcls_ref, bcls_ref, out_ref,
                        *, batch, seq_len):
    # x_ref    : (L*B, 1) int32, VMEM  time-major flattened, pre-clamped ids
    # proj_ref : (Vp, D)  f32,   VMEM  emb @ W_ih^T + (b_ih + b_hh)
    # whh_ref  : (D, D)   f32,   VMEM  W_hh^T
    # wcls_ref : (D, 128) f32,   VMEM  W_cls^T zero-padded to 128 lanes
    # bcls_ref : (1, 128) f32,   VMEM  b_cls zero-padded
    # out_ref  : (B, 128) f32          padded logits
    B, L = batch, seq_len
    N = B * L
    Vp, D = proj_ref.shape

    # Phase 1 -- embedding gather + input projection + biases as ONE one-hot
    # MXU matmul (replaces 64 scalar-addressed copies; nothing here touches
    # the scalar-ALU / vector-store slots beyond a single dot).
    ids = x_ref[...]                                               # (N, 1)
    onehot = (ids == lax.broadcasted_iota(jnp.int32, (N, Vp), 1)
              ).astype(jnp.float32)                                # (N, Vp)
    pre = jnp.dot(onehot, proj_ref[...],
                  preferred_element_type=jnp.float32)              # (N, D)

    # Phase 2 -- serial Elman recurrence, fully unrolled (static L).  The
    # projected inputs live in registers; each step is one MXU dot + tanh.
    whh = whh_ref[...]                                             # hoisted load
    h = jnp.zeros((B, D), dtype=jnp.float32)
    for t in range(L):
        x_t = pre[t * B:(t + 1) * B, :]          # sublane-tile-aligned slab
        h = jnp.tanh(x_t + jnp.dot(h, whh,
                                   preferred_element_type=jnp.float32))

    # Phase 3 -- classifier head on the last hidden state (unmasked (8,128)
    # lane-dense store; columns >= 7 are exactly zero).
    out_ref[...] = (jnp.dot(h, wcls_ref[...],
                            preferred_element_type=jnp.float32)
                    + bcls_ref[...])


def prepare_params(params):
    """One-time parameter-only preprocessing (hoisted out of the per-call path)."""
    emb = jnp.asarray(params["embedding"], jnp.float32)            # (V, D)
    V, D = emb.shape
    # Algebraic fold: proj[v] = emb[v] @ W_ih^T + (b_ih + b_hh).
    # padding_idx=0 stays correct: row 0 projects to the bias, identical to
    # x_t = 0 in the original formulation.
    proj = emb @ params["w_ih"].T + (params["b_ih"] + params["b_hh"])[None, :]
    Vp = ((V + 7) // 8) * 8                                        # pad vocab rows
    if Vp != V:
        proj = jnp.pad(proj, ((0, Vp - V), (0, 0)))
    wcls_t = jnp.zeros((D, CLS_PAD), jnp.float32).at[:, :NUM_CLASSES].set(
        params["w_cls"].T)
    bcls = jnp.zeros((1, CLS_PAD), jnp.float32).at[0, :NUM_CLASSES].set(
        params["b_cls"])
    return {
        "proj": proj.astype(jnp.float32),                          # (Vp, D)
        "whh_t": params["w_hh"].T.astype(jnp.float32),             # (D, D)
        "wcls_t": wcls_t,                                          # (D, 128)
        "bcls": bcls,                                              # (1, 128)
        "vocab_size": V,                                           # clamp bound
    }


def rnn_model_forward(x_idx, prepped):
    """Forward pass equivalent to RNNModel.forward(x) (y=None branch)."""
    proj = prepped["proj"]
    B, L = x_idx.shape

    # Per-call input prep: clamp OOB ids like jnp.take (to V-1, not the padded
    # row), then flatten time-major so each step reads a contiguous row slab.
    x_flat = jnp.clip(x_idx.astype(jnp.int32), 0,
                      prepped["vocab_size"] - 1).T.reshape(L * B, 1)

    vmem = pl.BlockSpec(memory_space=pltpu.MemorySpace.VMEM)
    out = pl.pallas_call(
        functools.partial(rnn_classify_kernel, batch=B, seq_len=L),
        out_shape=jax.ShapeDtypeStruct((B, CLS_PAD), jnp.float32),
        in_specs=[vmem, vmem, vmem, vmem, vmem],
        out_specs=vmem,
    )(x_flat, proj, prepped["whh_t"], prepped["wcls_t"], prepped["bcls"])
    return out[:, :NUM_CLASSES]


def make_params(key, vocab_size, vector_dim, num_classes=NUM_CLASSES):
    ks = jax.random.split(key, 7)
    emb = 0.1 * jax.random.normal(ks[0], (vocab_size, vector_dim), jnp.float32)
    emb = emb.at[0].set(0.0)  # padding_idx=0
    return {
        "embedding": emb,
        "w_ih": 0.1 * jax.random.normal(ks[1], (vector_dim, vector_dim), jnp.float32),
        "w_hh": 0.1 * jax.random.normal(ks[2], (vector_dim, vector_dim), jnp.float32),
        "b_ih": 0.1 * jax.random.normal(ks[3], (vector_dim,), jnp.float32),
        "b_hh": 0.1 * jax.random.normal(ks[4], (vector_dim,), jnp.float32),
        "w_cls": 0.1 * jax.random.normal(ks[5], (num_classes, vector_dim), jnp.float32),
        "b_cls": 0.1 * jax.random.normal(ks[6], (num_classes,), jnp.float32),
    }


def reference_forward(x_idx, params):
    """Pure-JAX reference replicating the PyTorch semantics."""
    x_emb = jnp.take(params["embedding"], x_idx, axis=0)           # (B, L, D)
    B, L, D = x_emb.shape
    h = jnp.zeros((B, D), jnp.float32)

    def step(h, xt):
        h_new = jnp.tanh(xt @ params["w_ih"].T + params["b_ih"]
                         + h @ params["w_hh"].T + params["b_hh"])
        return h_new, None

    h_last, _ = lax.scan(step, h, jnp.transpose(x_emb, (1, 0, 2)))
    return h_last @ params["w_cls"].T + params["b_cls"]


if __name__ == "__main__":
    # small shapes consistent with the module: batch=8, sentence_length=8,
    # vector_dim=32, vocab size=30
    B, L, D, V = 8, 8, 32, 30
    key = jax.random.PRNGKey(0)
    k_param, k_data = jax.random.split(key)

    params = make_params(k_param, V, D)
    x_idx = jax.random.randint(k_data, (B, L), 0, V, dtype=jnp.int32)

    prepped = prepare_params(params)            # one-time, off the hot path
    forward = jax.jit(rnn_model_forward)
    logits = jax.block_until_ready(forward(x_idx, prepped))

    ref = reference_forward(x_idx, params)
    assert logits.shape == (B, NUM_CLASSES)
    assert jnp.allclose(logits, ref, atol=1e-5, rtol=1e-5), "mismatch vs reference"

    # TODO(synk): training-path cross_entropy loss (y is not None) is not
    # implemented in-kernel; only the inference logits path is kernelized.
    print("KERNEL_OK")
</pallas_src>

<mosaic_0001>
module attributes {stable_mosaic.version = 11 : i64} {
  func.func @rnn_classify_kernel(%arg0: memref<64x1xi32, #tpu.memory_space<vmem>>, %arg1: memref<32x32xf32, #tpu.memory_space<vmem>>, %arg2: memref<32x32xf32, #tpu.memory_space<vmem>>, %arg3: memref<32x128xf32, #tpu.memory_space<vmem>>, %arg4: memref<1x128xf32, #tpu.memory_space<vmem>>, %arg5: memref<8x128xf32, #tpu.memory_space<vmem>>) attributes {dimension_semantics = [], scalar_prefetch = 0 : i64, scratch_operands = 0 : i64, tpu.core_type = #tpu.core_type<tc>} {
    %c0 = arith.constant 0 : index
    %c0_0 = arith.constant 0 : index
    %0 = vector.load %arg0[%c0, %c0_0] : memref<64x1xi32, #tpu.memory_space<vmem>>, vector<64x1xi32>
    %1 = tpu.iota {dimensions = array<i32: 1>} : vector<64x32xi32>
    %2 = vector.broadcast %0 : vector<64x1xi32> to vector<64x32xi32>
    %3 = arith.cmpi eq, %2, %1 : vector<64x32xi32>
    %4 = arith.extui %3 : vector<64x32xi1> to vector<64x32xi32>
    %5 = arith.sitofp %4 : vector<64x32xi32> to vector<64x32xf32>
    %c0_1 = arith.constant 0 : index
    %c0_2 = arith.constant 0 : index
    %6 = vector.load %arg1[%c0_1, %c0_2] : memref<32x32xf32, #tpu.memory_space<vmem>>, vector<32x32xf32>
    %cst = arith.constant dense<0.000000e+00> : vector<64x32xf32>
    %7 = tpu.matmul %5, %6, %cst {dimension_numbers = #tpu.dot_dimension_numbers<[1], [0], [0], [1], [0, 0, 1, 1], [], []>} : vector<64x32xf32>, vector<32x32xf32>, vector<64x32xf32> -> vector<64x32xf32>
    %c0_3 = arith.constant 0 : index
    %c0_4 = arith.constant 0 : index
    %8 = vector.load %arg2[%c0_3, %c0_4] : memref<32x32xf32, #tpu.memory_space<vmem>>, vector<32x32xf32>
    %cst_5 = arith.constant 0.000000e+00 : f32
    %9 = vector.broadcast %cst_5 : f32 to vector<8x32xf32>
    %10 = vector.extract_strided_slice %7 {offsets = [0, 0], sizes = [8, 32], strides = [1, 1]} : vector<64x32xf32> to vector<8x32xf32>
    %cst_6 = arith.constant dense<0.000000e+00> : vector<8x32xf32>
    %11 = tpu.matmul %9, %8, %cst_6 {dimension_numbers = #tpu.dot_dimension_numbers<[1], [0], [0], [1], [0, 0, 1, 1], [], []>} : vector<8x32xf32>, vector<32x32xf32>, vector<8x32xf32> -> vector<8x32xf32>
    %12 = arith.addf %10, %11 : vector<8x32xf32>
    %13 = math.tanh %12 : vector<8x32xf32>
    %14 = vector.extract_strided_slice %7 {offsets = [8, 0], sizes = [8, 32], strides = [1, 1]} : vector<64x32xf32> to vector<8x32xf32>
    %cst_7 = arith.constant dense<0.000000e+00> : vector<8x32xf32>
    %15 = tpu.matmul %13, %8, %cst_7 {dimension_numbers = #tpu.dot_dimension_numbers<[1], [0], [0], [1], [0, 0, 1, 1], [], []>} : vector<8x32xf32>, vector<32x32xf32>, vector<8x32xf32> -> vector<8x32xf32>
    %16 = arith.addf %14, %15 : vector<8x32xf32>
    %17 = math.tanh %16 : vector<8x32xf32>
    %18 = vector.extract_strided_slice %7 {offsets = [16, 0], sizes = [8, 32], strides = [1, 1]} : vector<64x32xf32> to vector<8x32xf32>
    %cst_8 = arith.constant dense<0.000000e+00> : vector<8x32xf32>
    %19 = tpu.matmul %17, %8, %cst_8 {dimension_numbers = #tpu.dot_dimension_numbers<[1], [0], [0], [1], [0, 0, 1, 1], [], []>} : vector<8x32xf32>, vector<32x32xf32>, vector<8x32xf32> -> vector<8x32xf32>
    %20 = arith.addf %18, %19 : vector<8x32xf32>
    %21 = math.tanh %20 : vector<8x32xf32>
    %22 = vector.extract_strided_slice %7 {offsets = [24, 0], sizes = [8, 32], strides = [1, 1]} : vector<64x32xf32> to vector<8x32xf32>
    %cst_9 = arith.constant dense<0.000000e+00> : vector<8x32xf32>
    %23 = tpu.matmul %21, %8, %cst_9 {dimension_numbers = #tpu.dot_dimension_numbers<[1], [0], [0], [1], [0, 0, 1, 1], [], []>} : vector<8x32xf32>, vector<32x32xf32>, vector<8x32xf32> -> vector<8x32xf32>
    %24 = arith.addf %22, %23 : vector<8x32xf32>
    %25 = math.tanh %24 : vector<8x32xf32>
    %26 = vector.extract_strided_slice %7 {offsets = [32, 0], sizes = [8, 32], strides = [1, 1]} : vector<64x32xf32> to vector<8x32xf32>
    %cst_10 = arith.constant dense<0.000000e+00> : vector<8x32xf32>
    %27 = tpu.matmul %25, %8, %cst_10 {dimension_numbers = #tpu.dot_dimension_numbers<[1], [0], [0], [1], [0, 0, 1, 1], [], []>} : vector<8x32xf32>, vector<32x32xf32>, vector<8x32xf32> -> vector<8x32xf32>
    %28 = arith.addf %26, %27 : vector<8x32xf32>
    %29 = math.tanh %28 : vector<8x32xf32>
    %30 = vector.extract_strided_slice %7 {offsets = [40, 0], sizes = [8, 32], strides = [1, 1]} : vector<64x32xf32> to vector<8x32xf32>
    %cst_11 = arith.constant dense<0.000000e+00> : vector<8x32xf32>
    %31 = tpu.matmul %29, %8, %cst_11 {dimension_numbers = #tpu.dot_dimension_numbers<[1], [0], [0], [1], [0, 0, 1, 1], [], []>} : vector<8x32xf32>, vector<32x32xf32>, vector<8x32xf32> -> vector<8x32xf32>
    %32 = arith.addf %30, %31 : vector<8x32xf32>
    %33 = math.tanh %32 : vector<8x32xf32>
    %34 = vector.extract_strided_slice %7 {offsets = [48, 0], sizes = [8, 32], strides = [1, 1]} : vector<64x32xf32> to vector<8x32xf32>
    %cst_12 = arith.constant dense<0.000000e+00> : vector<8x32xf32>
    %35 = tpu.matmul %33, %8, %cst_12 {dimension_numbers = #tpu.dot_dimension_numbers<[1], [0], [0], [1], [0, 0, 1, 1], [], []>} : vector<8x32xf32>, vector<32x32xf32>, vector<8x32xf32> -> vector<8x32xf32>
    %36 = arith.addf %34, %35 : vector<8x32xf32>
    %37 = math.tanh %36 : vector<8x32xf32>
    %38 = vector.extract_strided_slice %7 {offsets = [56, 0], sizes = [8, 32], strides = [1, 1]} : vector<64x32xf32> to vector<8x32xf32>
    %cst_13 = arith.constant dense<0.000000e+00> : vector<8x32xf32>
    %39 = tpu.matmul %37, %8, %cst_13 {dimension_numbers = #tpu.dot_dimension_numbers<[1], [0], [0], [1], [0, 0, 1, 1], [], []>} : vector<8x32xf32>, vector<32x32xf32>, vector<8x32xf32> -> vector<8x32xf32>
    %40 = arith.addf %38, %39 : vector<8x32xf32>
    %41 = math.tanh %40 : vector<8x32xf32>
    %c0_14 = arith.constant 0 : index
    %c0_15 = arith.constant 0 : index
    %42 = vector.load %arg3[%c0_14, %c0_15] : memref<32x128xf32, #tpu.memory_space<vmem>>, vector<32x128xf32>
    %cst_16 = arith.constant dense<0.000000e+00> : vector<8x128xf32>
    %43 = tpu.matmul %41, %42, %cst_16 {dimension_numbers = #tpu.dot_dimension_numbers<[1], [0], [0], [1], [0, 0, 1, 1], [], []>} : vector<8x32xf32>, vector<32x128xf32>, vector<8x128xf32> -> vector<8x128xf32>
    %c0_17 = arith.constant 0 : index
    %c0_18 = arith.constant 0 : index
    %44 = vector.load %arg4[%c0_17, %c0_18] : memref<1x128xf32, #tpu.memory_space<vmem>>, vector<1x128xf32>
    %45 = vector.broadcast %44 : vector<1x128xf32> to vector<8x128xf32>
    %46 = arith.addf %43, %45 : vector<8x128xf32>
    %c0_19 = arith.constant 0 : index
    %c0_20 = arith.constant 0 : index
    %47 = vector.load %arg5[%c0_19, %c0_20] : memref<8x128xf32, #tpu.memory_space<vmem>>, vector<8x128xf32>
    tpu.vector_store %arg5[%c0_19, %c0_20], %46 {strides = array<i32>} : memref<8x128xf32, #tpu.memory_space<vmem>>, vector<8x128xf32>,
    return
  }
}

</mosaic_0001>

<llo_original>
// kernel: rnn_model_forward.1
$region0: #{rnn_model_forward.1}
  #allocation0 [shape = 'u32[]', space=smem, size = 0x4, offset = 0x4, fixed_abs, tag = 'smem constant byte address 0x4 - core index']
  #allocation1 [shape = 'u32[144,128]{1,0:T(1,128)}', space=vmem, size = 0x12000, scoped, tag = 'internal scratch']
  %s0 = inlined_call_operand.vmem [shape: s32[64,1], index: 0, kind: input, shape index: {}]
  %s1 = inlined_call_operand.vmem [shape: f32[32,32], index: 1, kind: input, shape index: {}]
  %s2 = inlined_call_operand.vmem [shape: f32[32,32], index: 2, kind: input, shape index: {}]
  %s3 = inlined_call_operand.vmem [shape: f32[32,128], index: 3, kind: input, shape index: {}]
  %s4 = inlined_call_operand.vmem [shape: f32[1,128], index: 4, kind: input, shape index: {}]
  %s5 = inlined_call_operand.hbm [shape: f32[8,128], index: 5, kind: output, shape index: {}]
  %s6 = sld [smem:[#allocation0]]
  $region30: #{rnn_model_forward.1} parent=0
    _
  %s8 = ssub.s32 1, %s6
  %s9 = scalar_select 0, %s8, %s6
  $region1: #{rnn_model_forward.1} parent=0
    #allocation2 [shape = 'u8[4096]{0}', space=vmem, size = 0x1000, scoped, tag = 'output window, operand 0, single buffered']
    #allocation3 [shape = 's32[1]{0}', space=sflag, size = 0x4, scoped, tag = 'scoped memory for rnn_model_forward.1']
    %10 = vsyncpa [#allocation3], 0
    // Predicated region
    $region2: #{rnn_model_forward.1} parent=1 // pred_check
      _
    $region3: #{rnn_model_forward.1} parent=1 // pred_check_branch
      %12 = sbr.rel (0) target = $region5
    $region4: #{rnn_model_forward.1} parent=1 // pred_region
      _
    $region5: #{rnn_model_forward.1} parent=1 // pred_fallthru
      _
    // Predicated region
    $region6: #{rnn_model_forward.1} parent=1 // pred_check
      _
    $region7: #{rnn_model_forward.1} parent=1 // pred_check_branch
      %14 = sbr.rel (0) target = $region9
    $region8: #{rnn_model_forward.1} parent=1 // pred_region
      _
    $region9: #{rnn_model_forward.1} parent=1 // pred_fallthru
      _
    // Predicated region
    $region10: #{rnn_model_forward.1} parent=1 // pred_check
      _
    $region11: #{rnn_model_forward.1} parent=1 // pred_check_branch
      %16 = sbr.rel (0) target = $region13
    $region12: #{rnn_model_forward.1} parent=1 // pred_region
      _
    $region13: #{rnn_model_forward.1} parent=1 // pred_fallthru
      _
    // Predicated region
    $region14: #{rnn_model_forward.1} parent=1 // pred_check
      _
    $region15: #{rnn_model_forward.1} parent=1 // pred_check_branch
      %18 = sbr.rel (0) target = $region17
    $region16: #{rnn_model_forward.1} parent=1 // pred_region
      _
    $region17: #{rnn_model_forward.1} parent=1 // pred_fallthru
      _
    // Predicated region
    $region18: #{rnn_model_forward.1} parent=1 // pred_check
      _
    $region19: #{rnn_model_forward.1} parent=1 // pred_check_branch
      %20 = sbr.rel (0) target = $region21
    $region20: #{rnn_model_forward.1} parent=1 // pred_region
      _
    $region21: #{rnn_model_forward.1} parent=1 // pred_fallthru
      _
    %v21 = vld [vmem:[%s0] sm:$0xff]
    %v22 = vld [vmem:[%s0 + $0x8] sm:$0xff]
    %v23 = vld [vmem:[%s0 + $0x10] sm:$0xff]
    %v24 = vld [vmem:[%s0 + $0x18] sm:$0xff]
    %v25 = vld [vmem:[%s0 + $0x20] sm:$0xff]
    %v26 = vld [vmem:[%s0 + $0x28] sm:$0xff]
    %v27 = vld [vmem:[%s0 + $0x30] sm:$0xff]
    %v28 = vld [vmem:[%s0 + $0x38] sm:$0xff]
    %v29 = vlaneseq
    %v30 = vand.u32 %v29, 127
    %31 = vset.pattern.permute.xlu0 0
    %32 = vperm.xlu0 %31, %v21
    %v33 = vpop.permute.xlu0 %32
    %34 = vset.pattern.permute.xlu0 0
    %35 = vperm.xlu0 %34, %v22
    %v36 = vpop.permute.xlu0 %35
    %37 = vset.pattern.permute.xlu0 0
    %38 = vperm.xlu0 %37, %v23
    %v39 = vpop.permute.xlu0 %38
    %40 = vset.pattern.permute.xlu0 0
    %41 = vperm.xlu0 %40, %v24
    %v42 = vpop.permute.xlu0 %41
    %43 = vset.pattern.permute.xlu0 0
    %44 = vperm.xlu0 %43, %v25
    %v45 = vpop.permute.xlu0 %44
    %46 = vset.pattern.permute.xlu0 0
    %47 = vperm.xlu0 %46, %v26
    %v48 = vpop.permute.xlu0 %47
    %49 = vset.pattern.permute.xlu0 0
    %50 = vperm.xlu0 %49, %v27
    %v51 = vpop.permute.xlu0 %50
    %52 = vset.pattern.permute.xlu0 0
    %53 = vperm.xlu0 %52, %v28
    %v54 = vpop.permute.xlu0 %53
    %vm55 = vcmp.eq.s32.totalorder %v33, %v30
    %vm56 = vcmp.eq.s32.totalorder %v36, %v30
    %vm57 = vcmp.eq.s32.totalorder %v39, %v30
    %vm58 = vcmp.eq.s32.totalorder %v42, %v30
    %vm59 = vcmp.eq.s32.totalorder %v45, %v30
    %vm60 = vcmp.eq.s32.totalorder %v48, %v30
    %vm61 = vcmp.eq.s32.totalorder %v51, %v30
    %vm62 = vcmp.eq.s32.totalorder %v54, %v30
    %v63 = vsel %vm55, 1, 0
    %v64 = vsel %vm56, 1, 0
    %v65 = vsel %vm57, 1, 0
    %v66 = vsel %vm58, 1, 0
    %v67 = vsel %vm59, 1, 0
    %v68 = vsel %vm60, 1, 0
    %v69 = vsel %vm61, 1, 0
    %v70 = vsel %vm62, 1, 0
    %v71 = vcvt.s32.f32 %v63
    %v72 = vcvt.s32.f32 %v64
    %v73 = vcvt.s32.f32 %v65
    %v74 = vcvt.s32.f32 %v66
    %v75 = vcvt.s32.f32 %v67
    %v76 = vcvt.s32.f32 %v68
    %v77 = vcvt.s32.f32 %v69
    %v78 = vcvt.s32.f32 %v70
    %v79 = vld [vmem:[%s1] sm:$0xff]
    %v80 = vld [vmem:[%s1 + $0x8] sm:$0xff]
    %v81 = vld [vmem:[%s1 + $0x10] sm:$0xff]
    %v82 = vld [vmem:[%s1 + $0x18] sm:$0xff]
    %vm83 = vcmask 261120
    %v85 = vsel %vm83, %v71, 0
    %v88 = vsel %vm83, %v72, 0
    %v91 = vsel %vm83, %v73, 0
    %v94 = vsel %vm83, %v74, 0
    %v97 = vsel %vm83, %v75, 0
    %v100 = vsel %vm83, %v76, 0
    %v103 = vsel %vm83, %v77, 0
    %v106 = vsel %vm83, %v78, 0
    %108 = vmatprep.subr.mxu0 0.0
    %109 = vmatpush1.msra.mxu0 %v79
    %110 = vmatprep.subr.mxu0 0.0
    %111 = vmatpush1.msra.mxu0 %v80
    %112 = vmatprep.subr.mxu0 0.0
    %113 = vmatpush1.msra.mxu0 %v81
    %114 = vmatprep.subr.mxu0 0.0
    %115 = vmatpush1.msra.mxu0 %v82
    %116 = vmatprep.subr.mxu0 0.0
    %117 = vmatpush1.msra.mxu0 0.0
    %118 = vmatprep.subr.mxu0 0.0
    %119 = vmatpush1.msra.mxu0 0.0
    %120 = vmatprep.subr.mxu0 0.0
    %121 = vmatpush1.msra.mxu0 0.0
    %122 = vmatprep.subr.mxu0 0.0
    %123 = vmatpush1.msra.mxu0 0.0
    %124 = vmatprep.subr.mxu0 0.0
    %125 = vmatpush1.msra.mxu0 0.0
    %126 = vmatprep.subr.mxu0 0.0
    %127 = vmatpush1.msra.mxu0 0.0
    %128 = vmatprep.subr.mxu0 0.0
    %129 = vmatpush1.msra.mxu0 0.0
    %130 = vmatprep.subr.mxu0 0.0
    %131 = vmatpush1.msra.mxu0 0.0
    %132 = vmatprep.subr.mxu0 0.0
    %133 = vmatpush1.msra.mxu0 0.0
    %134 = vmatprep.subr.mxu0 0.0
    %135 = vmatpush1.msra.mxu0 0.0
    %136 = vmatprep.subr.mxu0 0.0
    %137 = vmatpush1.msra.mxu0 0.0
    %138 = vmatprep.subr.mxu0 0.0
    %139 = vmatpush1.msra.mxu0 0.0
    %140 = vmatprep.subr.mxu0 0.0
    %141 = vmatpush1.msra.mxu0 0.0
    %142 = vmatprep.subr.mxu0 0.0
    %143 = vmatpush1.msra.mxu0 0.0
    %144 = vmatprep.subr.mxu0 0.0
    %145 = vmatpush1.msra.mxu0 0.0
    %146 = vmatprep.subr.mxu0 0.0
    %147 = vmatpush1.msra.mxu0 0.0
    %148 = vmatprep.subr.mxu0 0.0
    %149 = vmatpush1.msra.mxu0 0.0
    %150 = vmatprep.subr.mxu0 0.0
    %151 = vmatpush1.msra.mxu0 0.0
    %152 = vmatprep.subr.mxu0 0.0
    %153 = vmatpush1.msra.mxu0 0.0
    %154 = vmatprep.subr.mxu0 0.0
    %155 = vmatpush1.msra.mxu0 0.0
    %156 = vmatprep.subr.mxu0 0.0
    %157 = vmatpush1.msra.mxu0 0.0
    %158 = vmatprep.subr.mxu0 0.0
    %159 = vmatpush1.msra.mxu0 0.0
    %160 = vmatprep.subr.mxu0 0.0
    %161 = vmatpush1.msra.mxu0 0.0
    %162 = vmatprep.subr.mxu0 0.0
    %163 = vmatpush1.msra.mxu0 0.0
    %164 = vmatprep.subr.mxu0 0.0
    %165 = vmatpush1.msra.mxu0 0.0
    %166 = vmatprep.subr.mxu0 0.0
    %167 = vmatpush1.msra.mxu0 0.0
    %168 = vmatprep.subr.mxu0 0.0
    %169 = vmatpush1.msra.mxu0 0.0
    %170 = vmatprep.subr.mxu0 0.0
    %171 = vmatpush1.msra.mxu0 0.0
    %172 = vmatprep.mubr.f32.mxu0 0.0
    %173 = vmatmul.mubr.f32.gmra.mrb[0].mxu0 %v85
    %v174 = vpop.f32.mrb[0].mxu0
    %v175 = vadd.f32 0.0, %v174
    %v176 = vpop.f32.mrb[0].mxu0
    %177 = vmatprep.mubr.f32.mxu0 0.0
    %178 = vmatmul.mubr.f32.gmra.mrb[0].mxu0 %v88
    %v179 = vpop.f32.mrb[0].mxu0
    %v180 = vadd.f32 0.0, %v179
    %v181 = vpop.f32.mrb[0].mxu0
    %182 = vmatprep.mubr.f32.mxu0 0.0
    %183 = vmatmul.mubr.f32.gmra.mrb[0].mxu0 %v91
    %v184 = vpop.f32.mrb[0].mxu0
    %v185 = vadd.f32 0.0, %v184
    %v186 = vpop.f32.mrb[0].mxu0
    %187 = vmatprep.mubr.f32.mxu0 0.0
    %188 = vmatmul.mubr.f32.gmra.mrb[0].mxu0 %v94
    %v189 = vpop.f32.mrb[0].mxu0
    %v190 = vadd.f32 0.0, %v189
    %v191 = vpop.f32.mrb[0].mxu0
    %192 = vmatprep.mubr.f32.mxu0 0.0
    %193 = vmatmul.mubr.f32.gmra.mrb[0].mxu0 %v97
    %v194 = vpop.f32.mrb[0].mxu0
    %v195 = vadd.f32 0.0, %v194
    %v196 = vpop.f32.mrb[0].mxu0
    %197 = vmatprep.mubr.f32.mxu0 0.0
    %198 = vmatmul.mubr.f32.gmra.mrb[0].mxu0 %v100
    %v199 = vpop.f32.mrb[0].mxu0
    %v200 = vadd.f32 0.0, %v199
    %v201 = vpop.f32.mrb[0].mxu0
    %202 = vmatprep.mubr.f32.mxu0 0.0
    %203 = vmatmul.mubr.f32.gmra.mrb[0].mxu0 %v103
    %v204 = vpop.f32.mrb[0].mxu0
    %v205 = vadd.f32 0.0, %v204
    %v206 = vpop.f32.mrb[0].mxu0
    %207 = vmatprep.mubr.f32.mxu0 0.0
    %208 = vmatmul.mubr.f32.gmra.mrb[0].mxu0 %v106
    %v209 = vpop.f32.mrb[0].mxu0
    %v210 = vadd.f32 0.0, %v209
    %v211 = vpop.f32.mrb[0].mxu0
    %212 = vdwg.mxu0
    %v213 = vld [vmem:[%s2] sm:$0xff]
    %v214 = vld [vmem:[%s2 + $0x8] sm:$0xff]
    %v215 = vld [vmem:[%s2 + $0x10] sm:$0xff]
    %v216 = vld [vmem:[%s2 + $0x18] sm:$0xff]
    %v218 = vsel %vm83, 0.0, 0
    %220 = vmatprep.subr.mxu0 0.0
    %221 = vmatpush1.msra.mxu0 %v213
    %222 = vmatprep.subr.mxu0 0.0
    %223 = vmatpush1.msra.mxu0 %v214
    %224 = vmatprep.subr.mxu0 0.0
    %225 = vmatpush1.msra.mxu0 %v215
    %226 = vmatprep.subr.mxu0 0.0
    %227 = vmatpush1.msra.mxu0 %v216
    %228 = vmatprep.subr.mxu0 0.0
    %229 = vmatpush1.msra.mxu0 0.0
    %230 = vmatprep.subr.mxu0 0.0
    %231 = vmatpush1.msra.mxu0 0.0
    %232 = vmatprep.subr.mxu0 0.0
    %233 = vmatpush1.msra.mxu0 0.0
    %234 = vmatprep.subr.mxu0 0.0
    %235 = vmatpush1.msra.mxu0 0.0
    %236 = vmatprep.subr.mxu0 0.0
    %237 = vmatpush1.msra.mxu0 0.0
    %238 = vmatprep.subr.mxu0 0.0
    %239 = vmatpush1.msra.mxu0 0.0
    %240 = vmatprep.subr.mxu0 0.0
    %241 = vmatpush1.msra.mxu0 0.0
    %242 = vmatprep.subr.mxu0 0.0
    %243 = vmatpush1.msra.mxu0 0.0
    %244 = vmatprep.subr.mxu0 0.0
    %245 = vmatpush1.msra.mxu0 0.0
    %246 = vmatprep.subr.mxu0 0.0
    %247 = vmatpush1.msra.mxu0 0.0
    %248 = vmatprep.subr.mxu0 0.0
    %249 = vmatpush1.msra.mxu0 0.0
    %250 = vmatprep.subr.mxu0 0.0
    %251 = vmatpush1.msra.mxu0 0.0
    %252 = vmatprep.subr.mxu0 0.0
    %253 = vmatpush1.msra.mxu0 0.0
    %254 = vmatprep.subr.mxu0 0.0
    %255 = vmatpush1.msra.mxu0 0.0
    %256 = vmatprep.subr.mxu0 0.0
    %257 = vmatpush1.msra.mxu0 0.0
    %258 = vmatprep.subr.mxu0 0.0
    %259 = vmatpush1.msra.mxu0 0.0
    %260 = vmatprep.subr.mxu0 0.0
    %261 = vmatpush1.msra.mxu0 0.0
    %262 = vmatprep.subr.mxu0 0.0
    %263 = vmatpush1.msra.mxu0 0.0
    %264 = vmatprep.subr.mxu0 0.0
    %265 = vmatpush1.msra.mxu0 0.0
    %266 = vmatprep.subr.mxu0 0.0
    %267 = vmatpush1.msra.mxu0 0.0
    %268 = vmatprep.subr.mxu0 0.0
    %269 = vmatpush1.msra.mxu0 0.0
    %270 = vmatprep.subr.mxu0 0.0
    %271 = vmatpush1.msra.mxu0 0.0
    %272 = vmatprep.subr.mxu0 0.0
    %273 = vmatpush1.msra.mxu0 0.0
    %274 = vmatprep.subr.mxu0 0.0
    %275 = vmatpush1.msra.mxu0 0.0
    %276 = vmatprep.subr.mxu0 0.0
    %277 = vmatpush1.msra.mxu0 0.0
    %278 = vmatprep.subr.mxu0 0.0
    %279 = vmatpush1.msra.mxu0 0.0
    %280 = vmatprep.subr.mxu0 0.0
    %281 = vmatpush1.msra.mxu0 0.0
    %282 = vmatprep.subr.mxu0 0.0
    %283 = vmatpush1.msra.mxu0 0.0
    %284 = vmatprep.mubr.f32.mxu0 0.0
    %285 = vmatmul.mubr.f32.gmra.mrb[0].mxu0 %v218
    %v286 = vpop.f32.mrb[0].mxu0
    %v287 = vadd.f32 0.0, %v286
    %v288 = vpop.f32.mrb[0].mxu0
    %289 = vdwg.mxu0
    %v290 = vadd.f32 %v175, %v287
    %v291 = vtanh.pop %v290
    %v293 = vsel %vm83, %v291, 0
    %295 = vmatprep.subr.mxu0 0.0
    %296 = vmatpush1.msra.mxu0 %v213
    %297 = vmatprep.subr.mxu0 0.0
    %298 = vmatpush1.msra.mxu0 %v214
    %299 = vmatprep.subr.mxu0 0.0
    %300 = vmatpush1.msra.mxu0 %v215
    %301 = vmatprep.subr.mxu0 0.0
    %302 = vmatpush1.msra.mxu0 %v216
    %303 = vmatprep.subr.mxu0 0.0
    %304 = vmatpush1.msra.mxu0 0.0
    %305 = vmatprep.subr.mxu0 0.0
    %306 = vmatpush1.msra.mxu0 0.0
    %307 = vmatprep.subr.mxu0 0.0
    %308 = vmatpush1.msra.mxu0 0.0
    %309 = vmatprep.subr.mxu0 0.0
    %310 = vmatpush1.msra.mxu0 0.0
    %311 = vmatprep.subr.mxu0 0.0
    %312 = vmatpush1.msra.mxu0 0.0
    %313 = vmatprep.subr.mxu0 0.0
    %314 = vmatpush1.msra.mxu0 0.0
    %315 = vmatprep.subr.mxu0 0.0
    %316 = vmatpush1.msra.mxu0 0.0
    %317 = vmatprep.subr.mxu0 0.0
    %318 = vmatpush1.msra.mxu0 0.0
    %319 = vmatprep.subr.mxu0 0.0
    %320 = vmatpush1.msra.mxu0 0.0
    %321 = vmatprep.subr.mxu0 0.0
    %322 = vmatpush1.msra.mxu0 0.0
    %323 = vmatprep.subr.mxu0 0.0
    %324 = vmatpush1.msra.mxu0 0.0
    %325 = vmatprep.subr.mxu0 0.0
    %326 = vmatpush1.msra.mxu0 0.0
    %327 = vmatprep.subr.mxu0 0.0
    %328 = vmatpush1.msra.mxu0 0.0
    %329 = vmatprep.subr.mxu0 0.0
    %330 = vmatpush1.msra.mxu0 0.0
    %331 = vmatprep.subr.mxu0 0.0
    %332 = vmatpush1.msra.mxu0 0.0
    %333 = vmatprep.subr.mxu0 0.0
    %334 = vmatpush1.msra.mxu0 0.0
    %335 = vmatprep.subr.mxu0 0.0
    %336 = vmatpush1.msra.mxu0 0.0
    %337 = vmatprep.subr.mxu0 0.0
    %338 = vmatpush1.msra.mxu0 0.0
    %339 = vmatprep.subr.mxu0 0.0
    %340 = vmatpush1.msra.mxu0 0.0
    %341 = vmatprep.subr.mxu0 0.0
    %342 = vmatpush1.msra.mxu0 0.0
    %343 = vmatprep.subr.mxu0 0.0
    %344 = vmatpush1.msra.mxu0 0.0
    %345 = vmatprep.subr.mxu0 0.0
    %346 = vmatpush1.msra.mxu0 0.0
    %347 = vmatprep.subr.mxu0 0.0
    %348 = vmatpush1.msra.mxu0 0.0
    %349 = vmatprep.subr.mxu0 0.0
    %350 = vmatpush1.msra.mxu0 0.0
    %351 = vmatprep.subr.mxu0 0.0
    %352 = vmatpush1.msra.mxu0 0.0
    %353 = vmatprep.subr.mxu0 0.0
    %354 = vmatpush1.msra.mxu0 0.0
    %355 = vmatprep.subr.mxu0 0.0
    %356 = vmatpush1.msra.mxu0 0.0
    %357 = vmatprep.subr.mxu0 0.0
    %358 = vmatpush1.msra.mxu0 0.0
    %359 = vmatprep.mubr.f32.mxu0 0.0
    %360 = vmatmul.mubr.f32.gmra.mrb[0].mxu0 %v293
    %v361 = vpop.f32.mrb[0].mxu0
    %v362 = vadd.f32 0.0, %v361
    %v363 = vpop.f32.mrb[0].mxu0
    %364 = vdwg.mxu0
    %v365 = vadd.f32 %v180, %v362
    %v366 = vtanh.pop %v365
    %v368 = vsel %vm83, %v366, 0
    %370 = vmatprep.subr.mxu0 0.0
    %371 = vmatpush1.msra.mxu0 %v213
    %372 = vmatprep.subr.mxu0 0.0
    %373 = vmatpush1.msra.mxu0 %v214
    %374 = vmatprep.subr.mxu0 0.0
    %375 = vmatpush1.msra.mxu0 %v215
    %376 = vmatprep.subr.mxu0 0.0
    %377 = vmatpush1.msra.mxu0 %v216
    %378 = vmatprep.subr.mxu0 0.0
    %379 = vmatpush1.msra.mxu0 0.0
    %380 = vmatprep.subr.mxu0 0.0
    %381 = vmatpush1.msra.mxu0 0.0
    %382 = vmatprep.subr.mxu0 0.0
    %383 = vmatpush1.msra.mxu0 0.0
    %384 = vmatprep.subr.mxu0 0.0
    %385 = vmatpush1.msra.mxu0 0.0
    %386 = vmatprep.subr.mxu0 0.0
    %387 = vmatpush1.msra.mxu0 0.0
    %388 = vmatprep.subr.mxu0 0.0
    %389 = vmatpush1.msra.mxu0 0.0
    %390 = vmatprep.subr.mxu0 0.0
    %391 = vmatpush1.msra.mxu0 0.0
    %392 = vmatprep.subr.mxu0 0.0
    %393 = vmatpush1.msra.mxu0 0.0
    %394 = vmatprep.subr.mxu0 0.0
    %395 = vmatpush1.msra.mxu0 0.0
    %396 = vmatprep.subr.mxu0 0.0
    %397 = vmatpush1.msra.mxu0 0.0
    %398 = vmatprep.subr.mxu0 0.0
    %399 = vmatpush1.msra.mxu0 0.0
    %400 = vmatprep.subr.mxu0 0.0
    %401 = vmatpush1.msra.mxu0 0.0
    %402 = vmatprep.subr.mxu0 0.0
    %403 = vmatpush1.msra.mxu0 0.0
    %404 = vmatprep.subr.mxu0 0.0
    %405 = vmatpush1.msra.mxu0 0.0
    %406 = vmatprep.subr.mxu0 0.0
    %407 = vmatpush1.msra.mxu0 0.0
    %408 = vmatprep.subr.mxu0 0.0
    %409 = vmatpush1.msra.mxu0 0.0
    %410 = vmatprep.subr.mxu0 0.0
    %411 = vmatpush1.msra.mxu0 0.0
    %412 = vmatprep.subr.mxu0 0.0
    %413 = vmatpush1.msra.mxu0 0.0
    %414 = vmatprep.subr.mxu0 0.0
    %415 = vmatpush1.msra.mxu0 0.0
    %416 = vmatprep.subr.mxu0 0.0
    %417 = vmatpush1.msra.mxu0 0.0
    %418 = vmatprep.subr.mxu0 0.0
    %419 = vmatpush1.msra.mxu0 0.0
    %420 = vmatprep.subr.mxu0 0.0
    %421 = vmatpush1.msra.mxu0 0.0
    %422 = vmatprep.subr.mxu0 0.0
    %423 = vmatpush1.msra.mxu0 0.0
    %424 = vmatprep.subr.mxu0 0.0
    %425 = vmatpush1.msra.mxu0 0.0
    %426 = vmatprep.subr.mxu0 0.0
    %427 = vmatpush1.msra.mxu0 0.0
    %428 = vmatprep.subr.mxu0 0.0
    %429 = vmatpush1.msra.mxu0 0.0
    %430 = vmatprep.subr.mxu0 0.0
    %431 = vmatpush1.msra.mxu0 0.0
    %432 = vmatprep.subr.mxu0 0.0
    %433 = vmatpush1.msra.mxu0 0.0
    %434 = vmatprep.mubr.f32.mxu0 0.0
    %435 = vmatmul.mubr.f32.gmra.mrb[0].mxu0 %v368
    %v436 = vpop.f32.mrb[0].mxu0
    %v437 = vadd.f32 0.0, %v436
    %v438 = vpop.f32.mrb[0].mxu0
    %439 = vdwg.mxu0
    %v440 = vadd.f32 %v185, %v437
    %v441 = vtanh.pop %v440
    %v443 = vsel %vm83, %v441, 0
    %445 = vmatprep.subr.mxu0 0.0
    %446 = vmatpush1.msra.mxu0 %v213
    %447 = vmatprep.subr.mxu0 0.0
    %448 = vmatpush1.msra.mxu0 %v214
    %449 = vmatprep.subr.mxu0 0.0
    %450 = vmatpush1.msra.mxu0 %v215
    %451 = vmatprep.subr.mxu0 0.0
    %452 = vmatpush1.msra.mxu0 %v216
    %453 = vmatprep.subr.mxu0 0.0
    %454 = vmatpush1.msra.mxu0 0.0
    %455 = vmatprep.subr.mxu0 0.0
    %456 = vmatpush1.msra.mxu0 0.0
    %457 = vmatprep.subr.mxu0 0.0
    %458 = vmatpush1.msra.mxu0 0.0
    %459 = vmatprep.subr.mxu0 0.0
    %460 = vmatpush1.msra.mxu0 0.0
    %461 = vmatprep.subr.mxu0 0.0
    %462 = vmatpush1.msra.mxu0 0.0
    %463 = vmatprep.subr.mxu0 0.0
    %464 = vmatpush1.msra.mxu0 0.0
    %465 = vmatprep.subr.mxu0 0.0
    %466 = vmatpush1.msra.mxu0 0.0
    %467 = vmatprep.subr.mxu0 0.0
    %468 = vmatpush1.msra.mxu0 0.0
    %469 = vmatprep.subr.mxu0 0.0
    %470 = vmatpush1.msra.mxu0 0.0
    %471 = vmatprep.subr.mxu0 0.0
    %472 = vmatpush1.msra.mxu0 0.0
    %473 = vmatprep.subr.mxu0 0.0
    %474 = vmatpush1.msra.mxu0 0.0
    %475 = vmatprep.subr.mxu0 0.0
    %476 = vmatpush1.msra.mxu0 0.0
    %477 = vmatprep.subr.mxu0 0.0
    %478 = vmatpush1.msra.mxu0 0.0
    %479 = vmatprep.subr.mxu0 0.0
    %480 = vmatpush1.msra.mxu0 0.0
    %481 = vmatprep.subr.mxu0 0.0
    %482 = vmatpush1.msra.mxu0 0.0
    %483 = vmatprep.subr.mxu0 0.0
    %484 = vmatpush1.msra.mxu0 0.0
    %485 = vmatprep.subr.mxu0 0.0
    %486 = vmatpush1.msra.mxu0 0.0
    %487 = vmatprep.subr.mxu0 0.0
    %488 = vmatpush1.msra.mxu0 0.0
    %489 = vmatprep.subr.mxu0 0.0
    %490 = vmatpush1.msra.mxu0 0.0
    %491 = vmatprep.subr.mxu0 0.0
    %492 = vmatpush1.msra.mxu0 0.0
    %493 = vmatprep.subr.mxu0 0.0
    %494 = vmatpush1.msra.mxu0 0.0
    %495 = vmatprep.subr.mxu0 0.0
    %496 = vmatpush1.msra.mxu0 0.0
    %497 = vmatprep.subr.mxu0 0.0
    %498 = vmatpush1.msra.mxu0 0.0
    %499 = vmatprep.subr.mxu0 0.0
    %500 = vmatpush1.msra.mxu0 0.0
    %501 = vmatprep.subr.mxu0 0.0
    %502 = vmatpush1.msra.mxu0 0.0
    %503 = vmatprep.subr.mxu0 0.0
    %504 = vmatpush1.msra.mxu0 0.0
    %505 = vmatprep.subr.mxu0 0.0
    %506 = vmatpush1.msra.mxu0 0.0
    %507 = vmatprep.subr.mxu0 0.0
    %508 = vmatpush1.msra.mxu0 0.0
    %509 = vmatprep.mubr.f32.mxu0 0.0
    %510 = vmatmul.mubr.f32.gmra.mrb[0].mxu0 %v443
    %v511 = vpop.f32.mrb[0].mxu0
    %v512 = vadd.f32 0.0, %v511
    %v513 = vpop.f32.mrb[0].mxu0
    %514 = vdwg.mxu0
    %v515 = vadd.f32 %v190, %v512
    %v516 = vtanh.pop %v515
    %v518 = vsel %vm83, %v516, 0
    %520 = vmatprep.subr.mxu0 0.0
    %521 = vmatpush1.msra.mxu0 %v213
    %522 = vmatprep.subr.mxu0 0.0
    %523 = vmatpush1.msra.mxu0 %v214
    %524 = vmatprep.subr.mxu0 0.0
    %525 = vmatpush1.msra.mxu0 %v215
    %526 = vmatprep.subr.mxu0 0.0
    %527 = vmatpush1.msra.mxu0 %v216
    %528 = vmatprep.subr.mxu0 0.0
    %529 = vmatpush1.msra.mxu0 0.0
    %530 = vmatprep.subr.mxu0 0.0
    %531 = vmatpush1.msra.mxu0 0.0
    %532 = vmatprep.subr.mxu0 0.0
    %533 = vmatpush1.msra.mxu0 0.0
    %534 = vmatprep.subr.mxu0 0.0
    %535 = vmatpush1.msra.mxu0 0.0
    %536 = vmatprep.subr.mxu0 0.0
    %537 = vmatpush1.msra.mxu0 0.0
    %538 = vmatprep.subr.mxu0 0.0
    %539 = vmatpush1.msra.mxu0 0.0
    %540 = vmatprep.subr.mxu0 0.0
    %541 = vmatpush1.msra.mxu0 0.0
    %542 = vmatprep.subr.mxu0 0.0
    %543 = vmatpush1.msra.mxu0 0.0
    %544 = vmatprep.subr.mxu0 0.0
    %545 = vmatpush1.msra.mxu0 0.0
    %546 = vmatprep.subr.mxu0 0.0
    %547 = vmatpush1.msra.mxu0 0.0
    %548 = vmatprep.subr.mxu0 0.0
    %549 = vmatpush1.msra.mxu0 0.0
    %550 = vmatprep.subr.mxu0 0.0
    %551 = vmatpush1.msra.mxu0 0.0
    %552 = vmatprep.subr.mxu0 0.0
    %553 = vmatpush1.msra.mxu0 0.0
    %554 = vmatprep.subr.mxu0 0.0
    %555 = vmatpush1.msra.mxu0 0.0
    %556 = vmatprep.subr.mxu0 0.0
    %557 = vmatpush1.msra.mxu0 0.0
    %558 = vmatprep.subr.mxu0 0.0
    %559 = vmatpush1.msra.mxu0 0.0
    %560 = vmatprep.subr.mxu0 0.0
    %561 = vmatpush1.msra.mxu0 0.0
    %562 = vmatprep.subr.mxu0 0.0
    %563 = vmatpush1.msra.mxu0 0.0
    %564 = vmatprep.subr.mxu0 0.0
    %565 = vmatpush1.msra.mxu0 0.0
    %566 = vmatprep.subr.mxu0 0.0
    %567 = vmatpush1.msra.mxu0 0.0
    %568 = vmatprep.subr.mxu0 0.0
    %569 = vmatpush1.msra.mxu0 0.0
    %570 = vmatprep.subr.mxu0 0.0
    %571 = vmatpush1.msra.mxu0 0.0
    %572 = vmatprep.subr.mxu0 0.0
    %573 = vmatpush1.msra.mxu0 0.0
    %574 = vmatprep.subr.mxu0 0.0
    %575 = vmatpush1.msra.mxu0 0.0
    %576 = vmatprep.subr.mxu0 0.0
    %577 = vmatpush1.msra.mxu0 0.0
    %578 = vmatprep.subr.mxu0 0.0
    %579 = vmatpush1.msra.mxu0 0.0
    %580 = vmatprep.subr.mxu0 0.0
    %581 = vmatpush1.msra.mxu0 0.0
    %582 = vmatprep.subr.mxu0 0.0
    %583 = vmatpush1.msra.mxu0 0.0
    %584 = vmatprep.mubr.f32.mxu0 0.0
    %585 = vmatmul.mubr.f32.gmra.mrb[0].mxu0 %v518
    %v586 = vpop.f32.mrb[0].mxu0
    %v587 = vadd.f32 0.0, %v586
    %v588 = vpop.f32.mrb[0].mxu0
    %589 = vdwg.mxu0
    %v590 = vadd.f32 %v195, %v587
    %v591 = vtanh.pop %v590
    %v593 = vsel %vm83, %v591, 0
    %595 = vmatprep.subr.mxu0 0.0
    %596 = vmatpush1.msra.mxu0 %v213
    %597 = vmatprep.subr.mxu0 0.0
    %598 = vmatpush1.msra.mxu0 %v214
    %599 = vmatprep.subr.mxu0 0.0
    %600 = vmatpush1.msra.mxu0 %v215
    %601 = vmatprep.subr.mxu0 0.0
    %602 = vmatpush1.msra.mxu0 %v216
    %603 = vmatprep.subr.mxu0 0.0
    %604 = vmatpush1.msra.mxu0 0.0
    %605 = vmatprep.subr.mxu0 0.0
    %606 = vmatpush1.msra.mxu0 0.0
    %607 = vmatprep.subr.mxu0 0.0
    %608 = vmatpush1.msra.mxu0 0.0
    %609 = vmatprep.subr.mxu0 0.0
    %610 = vmatpush1.msra.mxu0 0.0
    %611 = vmatprep.subr.mxu0 0.0
    %612 = vmatpush1.msra.mxu0 0.0
    %613 = vmatprep.subr.mxu0 0.0
    %614 = vmatpush1.msra.mxu0 0.0
    %615 = vmatprep.subr.mxu0 0.0
    %616 = vmatpush1.msra.mxu0 0.0
    %617 = vmatprep.subr.mxu0 0.0
    %618 = vmatpush1.msra.mxu0 0.0
    %619 = vmatprep.subr.mxu0 0.0
    %620 = vmatpush1.msra.mxu0 0.0
    %621 = vmatprep.subr.mxu0 0.0
    %622 = vmatpush1.msra.mxu0 0.0
    %623 = vmatprep.subr.mxu0 0.0
    %624 = vmatpush1.msra.mxu0 0.0
    %625 = vmatprep.subr.mxu0 0.0
    %626 = vmatpush1.msra.mxu0 0.0
    %627 = vmatprep.subr.mxu0 0.0
    %628 = vmatpush1.msra.mxu0 0.0
    %629 = vmatprep.subr.mxu0 0.0
    %630 = vmatpush1.msra.mxu0 0.0
    %631 = vmatprep.subr.mxu0 0.0
    %632 = vmatpush1.msra.mxu0 0.0
    %633 = vmatprep.subr.mxu0 0.0
    %634 = vmatpush1.msra.mxu0 0.0
    %635 = vmatprep.subr.mxu0 0.0
    %636 = vmatpush1.msra.mxu0 0.0
    %637 = vmatprep.subr.mxu0 0.0
    %638 = vmatpush1.msra.mxu0 0.0
    %639 = vmatprep.subr.mxu0 0.0
    %640 = vmatpush1.msra.mxu0 0.0
    %641 = vmatprep.subr.mxu0 0.0
    %642 = vmatpush1.msra.mxu0 0.0
    %643 = vmatprep.subr.mxu0 0.0
    %644 = vmatpush1.msra.mxu0 0.0
    %645 = vmatprep.subr.mxu0 0.0
    %646 = vmatpush1.msra.mxu0 0.0
    %647 = vmatprep.subr.mxu0 0.0
    %648 = vmatpush1.msra.mxu0 0.0
    %649 = vmatprep.subr.mxu0 0.0
    %650 = vmatpush1.msra.mxu0 0.0
    %651 = vmatprep.subr.mxu0 0.0
    %652 = vmatpush1.msra.mxu0 0.0
    %653 = vmatprep.subr.mxu0 0.0
    %654 = vmatpush1.msra.mxu0 0.0
    %655 = vmatprep.subr.mxu0 0.0
    %656 = vmatpush1.msra.mxu0 0.0
    %657 = vmatprep.subr.mxu0 0.0
    %658 = vmatpush1.msra.mxu0 0.0
    %659 = vmatprep.mubr.f32.mxu0 0.0
    %660 = vmatmul.mubr.f32.gmra.mrb[0].mxu0 %v593
    %v661 = vpop.f32.mrb[0].mxu0
    %v662 = vadd.f32 0.0, %v661
    %v663 = vpop.f32.mrb[0].mxu0
    %664 = vdwg.mxu0
    %v665 = vadd.f32 %v200, %v662
    %v666 = vtanh.pop %v665
    %v668 = vsel %vm83, %v666, 0
    %670 = vmatprep.subr.mxu0 0.0
    %671 = vmatpush1.msra.mxu0 %v213
    %672 = vmatprep.subr.mxu0 0.0
    %673 = vmatpush1.msra.mxu0 %v214
    %674 = vmatprep.subr.mxu0 0.0
    %675 = vmatpush1.msra.mxu0 %v215
    %676 = vmatprep.subr.mxu0 0.0
    %677 = vmatpush1.msra.mxu0 %v216
    %678 = vmatprep.subr.mxu0 0.0
    %679 = vmatpush1.msra.mxu0 0.0
    %680 = vmatprep.subr.mxu0 0.0
    %681 = vmatpush1.msra.mxu0 0.0
    %682 = vmatprep.subr.mxu0 0.0
    %683 = vmatpush1.msra.mxu0 0.0
    %684 = vmatprep.subr.mxu0 0.0
    %685 = vmatpush1.msra.mxu0 0.0
    %686 = vmatprep.subr.mxu0 0.0
    %687 = vmatpush1.msra.mxu0 0.0
    %688 = vmatprep.subr.mxu0 0.0
    %689 = vmatpush1.msra.mxu0 0.0
    %690 = vmatprep.subr.mxu0 0.0
    %691 = vmatpush1.msra.mxu0 0.0
    %692 = vmatprep.subr.mxu0 0.0
    %693 = vmatpush1.msra.mxu0 0.0
    %694 = vmatprep.subr.mxu0 0.0
    %695 = vmatpush1.msra.mxu0 0.0
    %696 = vmatprep.subr.mxu0 0.0
    %697 = vmatpush1.msra.mxu0 0.0
    %698 = vmatprep.subr.mxu0 0.0
    %699 = vmatpush1.msra.mxu0 0.0
    %700 = vmatprep.subr.mxu0 0.0
    %701 = vmatpush1.msra.mxu0 0.0
    %702 = vmatprep.subr.mxu0 0.0
    %703 = vmatpush1.msra.mxu0 0.0
    %704 = vmatprep.subr.mxu0 0.0
    %705 = vmatpush1.msra.mxu0 0.0
    %706 = vmatprep.subr.mxu0 0.0
    %707 = vmatpush1.msra.mxu0 0.0
    %708 = vmatprep.subr.mxu0 0.0
    %709 = vmatpush1.msra.mxu0 0.0
    %710 = vmatprep.subr.mxu0 0.0
    %711 = vmatpush1.msra.mxu0 0.0
    %712 = vmatprep.subr.mxu0 0.0
    %713 = vmatpush1.msra.mxu0 0.0
    %714 = vmatprep.subr.mxu0 0.0
    %715 = vmatpush1.msra.mxu0 0.0
    %716 = vmatprep.subr.mxu0 0.0
    %717 = vmatpush1.msra.mxu0 0.0
    %718 = vmatprep.subr.mxu0 0.0
    %719 = vmatpush1.msra.mxu0 0.0
    %720 = vmatprep.subr.mxu0 0.0
    %721 = vmatpush1.msra.mxu0 0.0
    %722 = vmatprep.subr.mxu0 0.0
    %723 = vmatpush1.msra.mxu0 0.0
    %724 = vmatprep.subr.mxu0 0.0
    %725 = vmatpush1.msra.mxu0 0.0
    %726 = vmatprep.subr.mxu0 0.0
    %727 = vmatpush1.msra.mxu0 0.0
    %728 = vmatprep.subr.mxu0 0.0
    %729 = vmatpush1.msra.mxu0 0.0
    %730 = vmatprep.subr.mxu0 0.0
    %731 = vmatpush1.msra.mxu0 0.0
    %732 = vmatprep.subr.mxu0 0.0
    %733 = vmatpush1.msra.mxu0 0.0
    %734 = vmatprep.mubr.f32.mxu0 0.0
    %735 = vmatmul.mubr.f32.gmra.mrb[0].mxu0 %v668
    %v736 = vpop.f32.mrb[0].mxu0
    %v737 = vadd.f32 0.0, %v736
    %v738 = vpop.f32.mrb[0].mxu0
    %739 = vdwg.mxu0
    %v740 = vadd.f32 %v205, %v737
    %v741 = vtanh.pop %v740
    %v743 = vsel %vm83, %v741, 0
    %745 = vmatprep.subr.mxu0 0.0
    %746 = vmatpush1.msra.mxu0 %v213
    %747 = vmatprep.subr.mxu0 0.0
    %748 = vmatpush1.msra.mxu0 %v214
    %749 = vmatprep.subr.mxu0 0.0
    %750 = vmatpush1.msra.mxu0 %v215
    %751 = vmatprep.subr.mxu0 0.0
    %752 = vmatpush1.msra.mxu0 %v216
    %753 = vmatprep.subr.mxu0 0.0
    %754 = vmatpush1.msra.mxu0 0.0
    %755 = vmatprep.subr.mxu0 0.0
    %756 = vmatpush1.msra.mxu0 0.0
    %757 = vmatprep.subr.mxu0 0.0
    %758 = vmatpush1.msra.mxu0 0.0
    %759 = vmatprep.subr.mxu0 0.0
    %760 = vmatpush1.msra.mxu0 0.0
    %761 = vmatprep.subr.mxu0 0.0
    %762 = vmatpush1.msra.mxu0 0.0
    %763 = vmatprep.subr.mxu0 0.0
    %764 = vmatpush1.msra.mxu0 0.0
    %765 = vmatprep.subr.mxu0 0.0
    %766 = vmatpush1.msra.mxu0 0.0
    %767 = vmatprep.subr.mxu0 0.0
    %768 = vmatpush1.msra.mxu0 0.0
    %769 = vmatprep.subr.mxu0 0.0
    %770 = vmatpush1.msra.mxu0 0.0
    %771 = vmatprep.subr.mxu0 0.0
    %772 = vmatpush1.msra.mxu0 0.0
    %773 = vmatprep.subr.mxu0 0.0
    %774 = vmatpush1.msra.mxu0 0.0
    %775 = vmatprep.subr.mxu0 0.0
    %776 = vmatpush1.msra.mxu0 0.0
    %777 = vmatprep.subr.mxu0 0.0
    %778 = vmatpush1.msra.mxu0 0.0
    %779 = vmatprep.subr.mxu0 0.0
    %780 = vmatpush1.msra.mxu0 0.0
    %781 = vmatprep.subr.mxu0 0.0
    %782 = vmatpush1.msra.mxu0 0.0
    %783 = vmatprep.subr.mxu0 0.0
    %784 = vmatpush1.msra.mxu0 0.0
    %785 = vmatprep.subr.mxu0 0.0
    %786 = vmatpush1.msra.mxu0 0.0
    %787 = vmatprep.subr.mxu0 0.0
    %788 = vmatpush1.msra.mxu0 0.0
    %789 = vmatprep.subr.mxu0 0.0
    %790 = vmatpush1.msra.mxu0 0.0
    %791 = vmatprep.subr.mxu0 0.0
    %792 = vmatpush1.msra.mxu0 0.0
    %793 = vmatprep.subr.mxu0 0.0
    %794 = vmatpush1.msra.mxu0 0.0
    %795 = vmatprep.subr.mxu0 0.0
    %796 = vmatpush1.msra.mxu0 0.0
    %797 = vmatprep.subr.mxu0 0.0
    %798 = vmatpush1.msra.mxu0 0.0
    %799 = vmatprep.subr.mxu0 0.0
    %800 = vmatpush1.msra.mxu0 0.0
    %801 = vmatprep.subr.mxu0 0.0
    %802 = vmatpush1.msra.mxu0 0.0
    %803 = vmatprep.subr.mxu0 0.0
    %804 = vmatpush1.msra.mxu0 0.0
    %805 = vmatprep.subr.mxu0 0.0
    %806 = vmatpush1.msra.mxu0 0.0
    %807 = vmatprep.subr.mxu0 0.0
    %808 = vmatpush1.msra.mxu0 0.0
    %809 = vmatprep.mubr.f32.mxu0 0.0
    %810 = vmatmul.mubr.f32.gmra.mrb[0].mxu0 %v743
    %v811 = vpop.f32.mrb[0].mxu0
    %v812 = vadd.f32 0.0, %v811
    %v813 = vpop.f32.mrb[0].mxu0
    %814 = vdwg.mxu0
    %v815 = vadd.f32 %v210, %v812
    %v816 = vtanh.pop %v815
    %v817 = vld [vmem:[%s3] sm:$0xff]
    %v818 = vld [vmem:[%s3 + $0x8] sm:$0xff]
    %v819 = vld [vmem:[%s3 + $0x10] sm:$0xff]
    %v820 = vld [vmem:[%s3 + $0x18] sm:$0xff]
    %v821 = vld [vmem:[%s4] sm:$0x1]
    %v823 = vlaneseq
    %v824 = vshrl.u32 %v823, 7
    %v825 = vsub.s32 0, %v824
    %v826 = vrot.slane %v821, %v825
    %v829 = vsel %vm83, %v816, 0
    %831 = vmatprep.subr.mxu0 0.0
    %832 = vmatpush1.msra.mxu0 %v817
    %833 = vmatprep.subr.mxu0 0.0
    %834 = vmatpush1.msra.mxu0 %v818
    %835 = vmatprep.subr.mxu0 0.0
    %836 = vmatpush1.msra.mxu0 %v819
    %837 = vmatprep.subr.mxu0 0.0
    %838 = vmatpush1.msra.mxu0 %v820
    %839 = vmatprep.subr.mxu0 0.0
    %840 = vmatpush1.msra.mxu0 0.0
    %841 = vmatprep.subr.mxu0 0.0
    %842 = vmatpush1.msra.mxu0 0.0
    %843 = vmatprep.subr.mxu0 0.0
    %844 = vmatpush1.msra.mxu0 0.0
    %845 = vmatprep.subr.mxu0 0.0
    %846 = vmatpush1.msra.mxu0 0.0
    %847 = vmatprep.subr.mxu0 0.0
    %848 = vmatpush1.msra.mxu0 0.0
    %849 = vmatprep.subr.mxu0 0.0
    %850 = vmatpush1.msra.mxu0 0.0
    %851 = vmatprep.subr.mxu0 0.0
    %852 = vmatpush1.msra.mxu0 0.0
    %853 = vmatprep.subr.mxu0 0.0
    %854 = vmatpush1.msra.mxu0 0.0
    %855 = vmatprep.subr.mxu0 0.0
    %856 = vmatpush1.msra.mxu0 0.0
    %857 = vmatprep.subr.mxu0 0.0
    %858 = vmatpush1.msra.mxu0 0.0
    %859 = vmatprep.subr.mxu0 0.0
    %860 = vmatpush1.msra.mxu0 0.0
    %861 = vmatprep.subr.mxu0 0.0
    %862 = vmatpush1.msra.mxu0 0.0
    %863 = vmatprep.subr.mxu0 0.0
    %864 = vmatpush1.msra.mxu0 0.0
    %865 = vmatprep.subr.mxu0 0.0
    %866 = vmatpush1.msra.mxu0 0.0
    %867 = vmatprep.subr.mxu0 0.0
    %868 = vmatpush1.msra.mxu0 0.0
    %869 = vmatprep.subr.mxu0 0.0
    %870 = vmatpush1.msra.mxu0 0.0
    %871 = vmatprep.subr.mxu0 0.0
    %872 = vmatpush1.msra.mxu0 0.0
    %873 = vmatprep.subr.mxu0 0.0
    %874 = vmatpush1.msra.mxu0 0.0
    %875 = vmatprep.subr.mxu0 0.0
    %876 = vmatpush1.msra.mxu0 0.0
    %877 = vmatprep.subr.mxu0 0.0
    %878 = vmatpush1.msra.mxu0 0.0
    %879 = vmatprep.subr.mxu0 0.0
    %880 = vmatpush1.msra.mxu0 0.0
    %881 = vmatprep.subr.mxu0 0.0
    %882 = vmatpush1.msra.mxu0 0.0
    %883 = vmatprep.subr.mxu0 0.0
    %884 = vmatpush1.msra.mxu0 0.0
    %885 = vmatprep.subr.mxu0 0.0
    %886 = vmatpush1.msra.mxu0 0.0
    %887 = vmatprep.subr.mxu0 0.0
    %888 = vmatpush1.msra.mxu0 0.0
    %889 = vmatprep.subr.mxu0 0.0
    %890 = vmatpush1.msra.mxu0 0.0
    %891 = vmatprep.subr.mxu0 0.0
    %892 = vmatpush1.msra.mxu0 0.0
    %893 = vmatprep.subr.mxu0 0.0
    %894 = vmatpush1.msra.mxu0 0.0
    %895 = vmatprep.mubr.f32.mxu0 0.0
    %896 = vmatmul.mubr.f32.gmra.mrb[0].mxu0 %v829
    %v897 = vpop.f32.mrb[0].mxu0
    %v898 = vadd.f32 %v826, %v897
    %v899 = vpop.f32.mrb[0].mxu0
    %900 = vdwg.mxu0
    %901 = vst [vmem:[#allocation2] sm:$0xff] %v898
    // Predicated region
    $region22: #{rnn_model_forward.1} parent=1 // pred_check
      _
    $region23: #{rnn_model_forward.1} parent=1 // pred_check_branch
      %903 = sbr.rel (0) target = $region25
    $region24: #{rnn_model_forward.1} parent=1 // pred_region
      %s905 = ssub.s32 128, 128
      %906 = vsyncadd [#allocation3], %s905
      %s908 = sshll.u32 [#allocation2], 4
      %s909 = int_to_ptr.vmem [resolvable:$true] %s908
      %911 = dma.vmem_to_hbm [thread:$0]  %s909, 128, %s5, [#allocation3]
    $region25: #{rnn_model_forward.1} parent=1 // pred_fallthru
      _
    // Predicated region
    $region26: #{rnn_model_forward.1} parent=1 // pred_check
      _
    $region27: #{rnn_model_forward.1} parent=1 // pred_check_branch
      %913 = sbr.rel (0) target = $region29
    $region28: #{rnn_model_forward.1} parent=1 // pred_region
      %914 = dma.done [#allocation3], 128
    $region29: #{rnn_model_forward.1} parent=1 // pred_fallthru
      _
    %915 = vsyncpa [#allocation3], 1

</llo_original>
